<compile_context>
chip_gen: v6e
topology: v6e:2x2x1
jax: 0.10.0
libtpu: 0.0.40
codegen_flags: <defaults>
</compile_context>

<pallas_src>
import jax
import jax.numpy as jnp
from jax.experimental import pallas as pl
from jax.experimental.pallas import tpu as pltpu

BN_EPS = 1e-5


def _residual_mlp_kernel(x_ref, w_ref, b_ref, o_ref):
    # In-kernel bf16 cast (VPU op, hidden under the matmul; avoids a wrapper-side
    # extra HBM pass over x).
    x = x_ref[...].astype(w_ref.dtype)

    # Two small MXU matmuls (fc path with BN folded in, shortcut path); f32 accum.
    z_fc = jnp.dot(x, w_ref[0], preferred_element_type=jnp.float32) + b_ref[0]
    z_sc = jnp.dot(x, w_ref[1], preferred_element_type=jnp.float32) + b_ref[1]

    # SiLU on the fc half only; sigmoid via a single EUP push (tanh form).
    sig = 0.5 * (jnp.tanh(0.5 * z_fc) + 1.0)
    o_ref[...] = (z_fc * sig + z_sc).astype(o_ref.dtype)


def fold_and_pack_params(w_fc_t, b_fc, gamma, beta, run_mean, run_var,
                         w_sc_t, b_sc, compute_dtype=jnp.bfloat16):
    """One-time parameter preparation (do at init, NOT in the per-call wrapper).

    Folds eval-mode BatchNorm into the fc weights/bias and stacks the fc and
    shortcut parameters along a leading axis:
        w_packed: (2, in_dim, out_dim)  bf16   [0]=BN-folded fc, [1]=shortcut
        b_packed: (2, 1, out_dim)       f32
    """
    s = gamma * jax.lax.rsqrt(run_var + BN_EPS)            # (out_dim,)
    w_fc_folded = w_fc_t * s[None, :]
    b_fc_folded = (b_fc - run_mean) * s + beta
    w_packed = jnp.stack([w_fc_folded, w_sc_t], axis=0).astype(compute_dtype)
    b_packed = jnp.stack([b_fc_folded, b_sc], axis=0).reshape(2, 1, -1)
    return w_packed, b_packed.astype(jnp.float32)


def _pick_tile_b(B, tile_b):
    """Batch tile: big enough to amortize per-step overhead, but >=2 grid steps
    when possible so v7x's second TensorCore is used; multiple of 8 (sublane)."""
    if B <= 8:
        return B
    tile_b = min(tile_b, B)
    if tile_b >= B:
        half = (((B + 1) // 2) + 7) // 8 * 8
        if 0 < half < B:
            tile_b = half
    return tile_b


def residual_mlp_block(x, w_packed, b_packed, *, tile_b=512, max_tile_n=512):
    B, in_dim = x.shape
    out_dim = w_packed.shape[-1]

    tile_b = _pick_tile_b(B, tile_b)
    tile_n = out_dim if out_dim <= max_tile_n else max_tile_n
    grid = (pl.cdiv(B, tile_b), pl.cdiv(out_dim, tile_n))

    # Explicit VMEM budget: double-buffered x / out tiles + weight/bias tiles.
    x_bytes = 2 * tile_b * in_dim * x.dtype.itemsize
    w_bytes = 2 * 2 * in_dim * tile_n * w_packed.dtype.itemsize
    b_bytes = 2 * 2 * tile_n * 4
    o_bytes = 2 * tile_b * tile_n * 4
    vmem_limit = min(x_bytes + w_bytes + b_bytes + o_bytes + (16 << 20), 64 << 20)

    return pl.pallas_call(
        _residual_mlp_kernel,
        out_shape=jax.ShapeDtypeStruct((B, out_dim), jnp.float32),
        grid=grid,
        in_specs=[
            pl.BlockSpec((tile_b, in_dim), lambda i, j: (i, 0)),        # x: batch-tiled
            pl.BlockSpec((2, in_dim, tile_n), lambda i, j: (0, 0, j)),  # stacked weights
            pl.BlockSpec((2, 1, tile_n), lambda i, j: (0, 0, j)),       # stacked biases
        ],
        out_specs=pl.BlockSpec((tile_b, tile_n), lambda i, j: (i, j)),
        compiler_params=pltpu.CompilerParams(
            dimension_semantics=("parallel", "parallel"),
            vmem_limit_bytes=vmem_limit),
    )(x, w_packed, b_packed)


def _reference(x, w_fc_t, b_fc, gamma, beta, run_mean, run_var, w_sc_t, b_sc):
    y = x @ w_fc_t + b_fc
    y = (y - run_mean) / jnp.sqrt(run_var + BN_EPS) * gamma + beta
    y = y * jax.nn.sigmoid(y)
    res = x @ w_sc_t + b_sc
    return y + res


if __name__ == "__main__":
    B, in_dim, out_dim = 8, 32, 64

    key = jax.random.PRNGKey(0)
    ks = jax.random.split(key, 8)

    x       = jax.random.normal(ks[0], (B, in_dim), dtype=jnp.float32)
    # fc: nn.Linear(in_dim, out_dim) -> weight (out_dim, in_dim); stored transposed.
    w_fc_t  = jax.random.normal(ks[1], (in_dim, out_dim), dtype=jnp.float32) * 0.1
    b_fc    = jax.random.normal(ks[2], (out_dim,), dtype=jnp.float32) * 0.1
    # BatchNorm1d(out_dim): affine params + running stats.
    gamma    = 1.0 + 0.05 * jax.random.normal(ks[3], (out_dim,), dtype=jnp.float32)
    beta     = 0.05 * jax.random.normal(ks[4], (out_dim,), dtype=jnp.float32)
    run_mean = 0.05 * jax.random.normal(ks[5], (out_dim,), dtype=jnp.float32)
    run_var  = 1.0 + 0.1 * jnp.abs(jax.random.normal(ks[6], (out_dim,), dtype=jnp.float32))
    # shortcut: nn.Linear(in_dim, out_dim) since in_dim != out_dim.
    w_sc_t  = jax.random.normal(ks[7], (in_dim, out_dim), dtype=jnp.float32) * 0.1
    b_sc    = jnp.linspace(-0.1, 0.1, out_dim, dtype=jnp.float32)

    # One-time parameter prep (BN fold + weight/bias stacking + bf16 cast).
    w_packed, b_packed = fold_and_pack_params(w_fc_t, b_fc, gamma, beta,
                                              run_mean, run_var, w_sc_t, b_sc)

    out = residual_mlp_block(x, w_packed, b_packed)
    out = jax.block_until_ready(out)

    ref = _reference(x, w_fc_t, b_fc, gamma, beta, run_mean, run_var,
                     w_sc_t, b_sc)
    assert out.shape == (B, out_dim)
    # Tolerance: bf16 MXU operands (exact tanh-form sigmoid, f32 epilogue).
    assert jnp.allclose(out, ref, atol=2e-2, rtol=2e-2), "mismatch vs reference"

    print("KERNEL_OK")
</pallas_src>

<mosaic_0001>
module attributes {stable_mosaic.version = 11 : i64} {
  func.func @_residual_mlp_kernel(%arg0: i32, %arg1: i32, %arg2: memref<8x32xf32, #tpu.memory_space<vmem>>, %arg3: memref<2x32x64xbf16, #tpu.memory_space<vmem>>, %arg4: memref<2x1x64xf32, #tpu.memory_space<vmem>>, %arg5: memref<8x64xf32, #tpu.memory_space<vmem>>) attributes {dimension_semantics = [#tpu.dimension_semantics<parallel>, #tpu.dimension_semantics<parallel>], iteration_bounds = array<i64: 1, 1>, scalar_prefetch = 0 : i64, scratch_operands = 0 : i64, tpu.core_type = #tpu.core_type<tc>, window_params = [{transform_indices = @transform_0, window_bounds = array<i64: 8, 32>}, {transform_indices = @transform_1, window_bounds = array<i64: 2, 32, 64>}, {transform_indices = @transform_2, window_bounds = array<i64: 2, 1, 64>}, {transform_indices = @transform_3, window_bounds = array<i64: 8, 64>}]} {
    %c0 = arith.constant 0 : index
    %c0_0 = arith.constant 0 : index
    %0 = vector.load %arg2[%c0, %c0_0] : memref<8x32xf32, #tpu.memory_space<vmem>>, vector<8x32xf32>
    %1 = arith.truncf %0 : vector<8x32xf32> to vector<8x32xbf16>
    %c0_1 = arith.constant 0 : index
    %c0_2 = arith.constant 0 : index
    %c0_3 = arith.constant 0 : index
    %2 = vector.load %arg3[%c0_1, %c0_2, %c0_3] : memref<2x32x64xbf16, #tpu.memory_space<vmem>>, vector<1x32x64xbf16>
    %3 = vector.shape_cast %2 : vector<1x32x64xbf16> to vector<32x64xbf16>
    %cst = arith.constant dense<0.000000e+00> : vector<8x64xf32>
    %4 = tpu.matmul %1, %3, %cst {dimension_numbers = #tpu.dot_dimension_numbers<[1], [0], [0], [1], [0, 0, 1, 1], [], []>} : vector<8x32xbf16>, vector<32x64xbf16>, vector<8x64xf32> -> vector<8x64xf32>
    %c0_4 = arith.constant 0 : index
    %c0_5 = arith.constant 0 : index
    %c0_6 = arith.constant 0 : index
    %5 = vector.load %arg4[%c0_4, %c0_5, %c0_6] : memref<2x1x64xf32, #tpu.memory_space<vmem>>, vector<1x1x64xf32>
    %6 = vector.shape_cast %5 : vector<1x1x64xf32> to vector<1x64xf32>
    %7 = vector.broadcast %6 : vector<1x64xf32> to vector<8x64xf32>
    %8 = arith.addf %4, %7 : vector<8x64xf32>
    %c1 = arith.constant 1 : index
    %c0_7 = arith.constant 0 : index
    %c0_8 = arith.constant 0 : index
    %9 = vector.load %arg3[%c1, %c0_7, %c0_8] : memref<2x32x64xbf16, #tpu.memory_space<vmem>>, vector<1x32x64xbf16>
    %10 = vector.shape_cast %9 : vector<1x32x64xbf16> to vector<32x64xbf16>
    %cst_9 = arith.constant dense<0.000000e+00> : vector<8x64xf32>
    %11 = tpu.matmul %1, %10, %cst_9 {dimension_numbers = #tpu.dot_dimension_numbers<[1], [0], [0], [1], [0, 0, 1, 1], [], []>} : vector<8x32xbf16>, vector<32x64xbf16>, vector<8x64xf32> -> vector<8x64xf32>
    %c1_10 = arith.constant 1 : index
    %c0_11 = arith.constant 0 : index
    %c0_12 = arith.constant 0 : index
    %12 = vector.load %arg4[%c1_10, %c0_11, %c0_12] : memref<2x1x64xf32, #tpu.memory_space<vmem>>, vector<1x1x64xf32>
    %13 = vector.shape_cast %12 : vector<1x1x64xf32> to vector<1x64xf32>
    %14 = vector.broadcast %13 : vector<1x64xf32> to vector<8x64xf32>
    %15 = arith.addf %11, %14 : vector<8x64xf32>
    %cst_13 = arith.constant 5.000000e-01 : f32
    %16 = vector.broadcast %cst_13 : f32 to vector<8x64xf32>
    %17 = arith.mulf %16, %8 : vector<8x64xf32>
    %18 = math.tanh %17 : vector<8x64xf32>
    %cst_14 = arith.constant 1.000000e+00 : f32
    %19 = vector.broadcast %cst_14 : f32 to vector<8x64xf32>
    %20 = arith.addf %18, %19 : vector<8x64xf32>
    %cst_15 = arith.constant 5.000000e-01 : f32
    %21 = vector.broadcast %cst_15 : f32 to vector<8x64xf32>
    %22 = arith.mulf %21, %20 : vector<8x64xf32>
    %23 = arith.mulf %8, %22 : vector<8x64xf32>
    %24 = arith.addf %23, %15 : vector<8x64xf32>
    %c0_16 = arith.constant 0 : index
    %c0_17 = arith.constant 0 : index
    %25 = vector.load %arg5[%c0_16, %c0_17] : memref<8x64xf32, #tpu.memory_space<vmem>>, vector<8x64xf32>
    tpu.vector_store %arg5[%c0_16, %c0_17], %24 {strides = array<i32>} : memref<8x64xf32, #tpu.memory_space<vmem>>, vector<8x64xf32>,
    return
  }
  func.func @transform_0(%arg0: i32, %arg1: i32) -> (i32, i32) {
    %c0_i32 = arith.constant 0 : i32
    %c0_i32_0 = arith.constant 0 : i32
    return %arg0, %c0_i32 : i32, i32
  }
  func.func @transform_1(%arg0: i32, %arg1: i32) -> (i32, i32, i32) {
    %c0_i32 = arith.constant 0 : i32
    %c0_i32_0 = arith.constant 0 : i32
    %c0_i32_1 = arith.constant 0 : i32
    return %c0_i32, %c0_i32_0, %arg1 : i32, i32, i32
  }
  func.func @transform_2(%arg0: i32, %arg1: i32) -> (i32, i32, i32) {
    %c0_i32 = arith.constant 0 : i32
    %c0_i32_0 = arith.constant 0 : i32
    %c0_i32_1 = arith.constant 0 : i32
    return %c0_i32, %c0_i32_0, %arg1 : i32, i32, i32
  }
  func.func @transform_3(%arg0: i32, %arg1: i32) -> (i32, i32) {
    %c0_i32 = arith.constant 0 : i32
    return %arg0, %arg1 : i32, i32
  }
}

</mosaic_0001>

<llo_original>
// kernel: tpu_custom_call.1
$region0: #{tpu_custom_call.1}
  #allocation0 [shape = 'u32[]', space=smem, size = 0x4, offset = 0x4, fixed_abs, tag = 'smem constant byte address 0x4 - core index']
  #allocation1 [shape = 'u32[144,128]{1,0:T(1,128)}', space=vmem, size = 0x12000, scoped, tag = 'internal scratch']
  %s0 = inlined_call_operand.hbm [shape: f32[8,32], index: 0, kind: input, shape index: {}]
  %s1 = inlined_call_operand.hbm [shape: bf16[2,32,64], index: 1, kind: input, shape index: {}]
  %s2 = inlined_call_operand.vmem [shape: f32[2,1,64], index: 2, kind: input, shape index: {}]
  %s3 = inlined_call_operand.hbm [shape: f32[8,64], index: 3, kind: output, shape index: {}]
  %s4 = sld [smem:[#allocation0]]
  $region30: #{tpu_custom_call.1} parent=0
    _
  %s6 = ssub.s32 1, %s4
  %s7 = scalar_select 0, %s6, %s4
  $region1: #{tpu_custom_call.1} parent=0
    #allocation2 [shape = 'u8[4096]{0}', space=vmem, size = 0x1000, scoped, tag = 'input window, operand 0, single buffered']
    #allocation3 [shape = 's32[1]{0}', space=sflag, size = 0x4, scoped, tag = 'scoped memory for tpu_custom_call.1']
    #allocation4 [shape = 's32[1]{0}', space=sflag, size = 0x4, scoped, tag = 'scoped memory for tpu_custom_call.1']
    #allocation5 [shape = 'u8[16384]{0}', space=vmem, size = 0x4000, scoped, tag = 'input window, operand 1, single buffered']
    #allocation6 [shape = 's32[1]{0}', space=sflag, size = 0x4, scoped, tag = 'scoped memory for tpu_custom_call.1']
    #allocation7 [shape = 'u8[4096]{0}', space=vmem, size = 0x1000, scoped, tag = 'output window, operand 0, single buffered']
    %8 = vsyncpa [#allocation3], 0
    %9 = vsyncpa [#allocation6], 0
    %10 = vsyncpa [#allocation4], 0
    // Predicated region
    $region2: #{tpu_custom_call.1} parent=1 // pred_check
      _
    $region3: #{tpu_custom_call.1} parent=1 // pred_check_branch
      %12 = sbr.rel (0) target = $region5
    $region4: #{tpu_custom_call.1} parent=1 // pred_region
      %s14 = ssub.s32 128, 128
      %15 = vsyncadd [#allocation3], %s14
      %s17 = sshll.u32 [#allocation2], 4
      %s18 = int_to_ptr.vmem [resolvable:$true] %s17
      %20 = dma.hbm_to_vmem [thread:$0]  %s0, 128, %s18, [#allocation3]
    $region5: #{tpu_custom_call.1} parent=1 // pred_fallthru
      _
    // Predicated region
    $region6: #{tpu_custom_call.1} parent=1 // pred_check
      _
    $region7: #{tpu_custom_call.1} parent=1 // pred_check_branch
      %22 = sbr.rel (0) target = $region9
    $region8: #{tpu_custom_call.1} parent=1 // pred_region
      %s24 = ssub.s32 512, 512
      %25 = vsyncadd [#allocation6], %s24
      %s26 = sshll.u32 [#allocation5], 4
      %s27 = int_to_ptr.vmem [resolvable:$true] %s26
      %32 = dma.hbm_to_vmem [thread:$0]  %s1, 512, %s27, [#allocation6], 64, 64, 4
    $region9: #{tpu_custom_call.1} parent=1 // pred_fallthru
      _
    // Predicated region
    $region10: #{tpu_custom_call.1} parent=1 // pred_check
      _
    $region11: #{tpu_custom_call.1} parent=1 // pred_check_branch
      %34 = sbr.rel (0) target = $region13
    $region12: #{tpu_custom_call.1} parent=1 // pred_region
      _
    $region13: #{tpu_custom_call.1} parent=1 // pred_fallthru
      _
    // Predicated region
    $region14: #{tpu_custom_call.1} parent=1 // pred_check
      _
    $region15: #{tpu_custom_call.1} parent=1 // pred_check_branch
      %36 = sbr.rel (0) target = $region17
    $region16: #{tpu_custom_call.1} parent=1 // pred_region
      %37 = dma.done [#allocation3], 128
    $region17: #{tpu_custom_call.1} parent=1 // pred_fallthru
      _
    // Predicated region
    $region18: #{tpu_custom_call.1} parent=1 // pred_check
      _
    $region19: #{tpu_custom_call.1} parent=1 // pred_check_branch
      %39 = sbr.rel (0) target = $region21
    $region20: #{tpu_custom_call.1} parent=1 // pred_region
      %40 = dma.done [#allocation6], 512
    $region21: #{tpu_custom_call.1} parent=1 // pred_fallthru
      _
    %v42 = vld [vmem:[#allocation2] sm:$0xff]
    %v43 = vpack.c.bf16 %v42, %v42
    %v44 = vld [vmem:[#allocation5] sm:$0xf]
    %v45 = vld [vmem:[#allocation5 + $0x4] sm:$0xf]
    %v46 = vld [vmem:[#allocation5 + $0x8] sm:$0xf]
    %v47 = vld [vmem:[#allocation5 + $0xc] sm:$0xf]
    %v48 = vld [vmem:[%s2] sm:$0x1]
    %v50 = vlaneseq
    %v51 = vshrl.u32 %v50, 7
    %v52 = vsub.s32 0, %v51
    %v53 = vrot.slane %v48, %v52
    %v59 = vunpack.c.l.b16 %v44
    %v60 = vunpack.c.l.b16 %v45
    %v61 = vunpack.c.l.b16 %v46
    %v62 = vunpack.c.l.b16 %v47
    %v63 = vpack.c.b16 %v60, %v59
    %v64 = vpack.c.b16 %v62, %v61
    %vm67 = vcmask 261120
    %v69 = vsel %vm67, %v43, 0
    %71 = vmatprep.subr.bf16.mxu0 0
    %72 = vmatpush1.bf16.msra.mxu0 0
    %73 = vmatprep.subr.bf16.mxu0 0
    %74 = vmatpush1.bf16.msra.mxu0 0
    %75 = vmatprep.subr.bf16.mxu0 0
    %76 = vmatpush1.bf16.msra.mxu0 0
    %77 = vmatprep.subr.bf16.mxu0 0
    %78 = vmatpush1.bf16.msra.mxu0 0
    %79 = vmatprep.subr.bf16.mxu0 0
    %80 = vmatpush1.bf16.msra.mxu0 0
    %81 = vmatprep.subr.bf16.mxu0 0
    %82 = vmatpush1.bf16.msra.mxu0 0
    %83 = vmatprep.subr.bf16.mxu0 0
    %84 = vmatpush1.bf16.msra.mxu0 %v64
    %85 = vmatprep.subr.bf16.mxu0 0
    %86 = vmatpush1.bf16.msra.mxu0 %v63
    %87 = vmatprep.subr.bf16.mxu0 0
    %88 = vmatpush2.bf16.msra.mxu0 0
    %89 = vmatprep.subr.bf16.mxu0 0
    %90 = vmatpush2.bf16.msra.mxu0 0
    %91 = vmatprep.subr.bf16.mxu0 0
    %92 = vmatpush2.bf16.msra.mxu0 0
    %93 = vmatprep.subr.bf16.mxu0 0
    %94 = vmatpush2.bf16.msra.mxu0 0
    %95 = vmatprep.subr.bf16.mxu0 0
    %96 = vmatpush2.bf16.msra.mxu0 0
    %97 = vmatprep.subr.bf16.mxu0 0
    %98 = vmatpush2.bf16.msra.mxu0 0
    %99 = vmatprep.subr.bf16.mxu0 0
    %100 = vmatpush2.bf16.msra.mxu0 0
    %101 = vmatprep.subr.bf16.mxu0 0
    %102 = vmatpush2.bf16.msra.mxu0 0
    %103 = vmatprep.mubr.bf16.mxu0 0
    %104 = vmatmul.mubr.bf16.gmra.mxu0 %v69
    %v105 = vpop.f32.mrf.mxu0
    %v106 = vadd.f32 %v53, %v105
    %v107 = vpop.f32.mrf.mxu0
    %v108 = vpop.f32.mrf.mxu0
    %v109 = vpop.f32.mrf.mxu0
    %110 = vdwg.mxu0
    %s111 = scalar_lea.vmem [#allocation5], 16
    %v112 = vld [vmem:[%s111] sm:$0xf]
    %v113 = vld [vmem:[%s111 + $0x4] sm:$0xf]
    %v114 = vld [vmem:[%s111 + $0x8] sm:$0xf]
    %v115 = vld [vmem:[%s111 + $0xc] sm:$0xf]
    %s116 = scalar_lea.vmem %s2, 1
    %v117 = vld [vmem:[%s116] sm:$0x1]
    %v119 = vlaneseq
    %v120 = vshrl.u32 %v119, 7
    %v121 = vsub.s32 0, %v120
    %v122 = vrot.slane %v117, %v121
    %v128 = vunpack.c.l.b16 %v112
    %v129 = vunpack.c.l.b16 %v113
    %v130 = vunpack.c.l.b16 %v114
    %v131 = vunpack.c.l.b16 %v115
    %v132 = vpack.c.b16 %v129, %v128
    %v133 = vpack.c.b16 %v131, %v130
    %136 = vmatprep.subr.bf16.mxu0 0
    %137 = vmatpush1.bf16.msra.mxu0 0
    %138 = vmatprep.subr.bf16.mxu0 0
    %139 = vmatpush1.bf16.msra.mxu0 0
    %140 = vmatprep.subr.bf16.mxu0 0
    %141 = vmatpush1.bf16.msra.mxu0 0
    %142 = vmatprep.subr.bf16.mxu0 0
    %143 = vmatpush1.bf16.msra.mxu0 0
    %144 = vmatprep.subr.bf16.mxu0 0
    %145 = vmatpush1.bf16.msra.mxu0 0
    %146 = vmatprep.subr.bf16.mxu0 0
    %147 = vmatpush1.bf16.msra.mxu0 0
    %148 = vmatprep.subr.bf16.mxu0 0
    %149 = vmatpush1.bf16.msra.mxu0 %v133
    %150 = vmatprep.subr.bf16.mxu0 0
    %151 = vmatpush1.bf16.msra.mxu0 %v132
    %152 = vmatprep.subr.bf16.mxu0 0
    %153 = vmatpush2.bf16.msra.mxu0 0
    %154 = vmatprep.subr.bf16.mxu0 0
    %155 = vmatpush2.bf16.msra.mxu0 0
    %156 = vmatprep.subr.bf16.mxu0 0
    %157 = vmatpush2.bf16.msra.mxu0 0
    %158 = vmatprep.subr.bf16.mxu0 0
    %159 = vmatpush2.bf16.msra.mxu0 0
    %160 = vmatprep.subr.bf16.mxu0 0
    %161 = vmatpush2.bf16.msra.mxu0 0
    %162 = vmatprep.subr.bf16.mxu0 0
    %163 = vmatpush2.bf16.msra.mxu0 0
    %164 = vmatprep.subr.bf16.mxu0 0
    %165 = vmatpush2.bf16.msra.mxu0 0
    %166 = vmatprep.subr.bf16.mxu0 0
    %167 = vmatpush2.bf16.msra.mxu0 0
    %168 = vmatprep.mubr.bf16.mxu0 0
    %169 = vmatmul.mubr.bf16.gmra.mxu0 %v69
    %v170 = vpop.f32.mrf.mxu0
    %v171 = vadd.f32 %v122, %v170
    %v172 = vpop.f32.mrf.mxu0
    %v173 = vpop.f32.mrf.mxu0
    %v174 = vpop.f32.mrf.mxu0
    %175 = vdwg.mxu0
    %v176 = vmul.f32 %v106, 0.5
    %v177 = vtanh.pop %v176
    %v178 = vadd.f32 %v177, 1.0
    %v179 = vmul.f32 %v178, 0.5
    %v180 = vmul.f32 %v106, %v179
    %v181 = vadd.f32 %v180, %v171
    %vm182 = vcmask 523264
    %183 = vst.msk [vmem:[#allocation7] sm:$0xff] %vm182, %v181
    // Predicated region
    $region22: #{tpu_custom_call.1} parent=1 // pred_check
      _
    $region23: #{tpu_custom_call.1} parent=1 // pred_check_branch
      %185 = sbr.rel (0) target = $region25
    $region24: #{tpu_custom_call.1} parent=1 // pred_region
      %s187 = ssub.s32 128, 128
      %188 = vsyncadd [#allocation4], %s187
      %s190 = sshll.u32 [#allocation7], 4
      %s191 = int_to_ptr.vmem [resolvable:$true] %s190
      %193 = dma.vmem_to_hbm [thread:$0]  %s191, 128, %s3, [#allocation4]
    $region25: #{tpu_custom_call.1} parent=1 // pred_fallthru
      _
    // Predicated region
    $region26: #{tpu_custom_call.1} parent=1 // pred_check
      _
    $region27: #{tpu_custom_call.1} parent=1 // pred_check_branch
      %195 = sbr.rel (0) target = $region29
    $region28: #{tpu_custom_call.1} parent=1 // pred_region
      %196 = dma.done [#allocation4], 128
    $region29: #{tpu_custom_call.1} parent=1 // pred_fallthru
      _
    %197 = vsyncpa [#allocation3], 1
    %198 = vsyncpa [#allocation6], 1
    %199 = vsyncpa [#allocation4], 1

</llo_original>
